<compile_context>
chip_gen: v7x
topology: tpu7x:2x2x1
jax: 0.10.0
libtpu: 0.0.40
codegen_flags: <defaults>
</compile_context>

<pallas_src>
import functools
import math

import jax
import jax.numpy as jnp
from jax.experimental import pallas as pl
from jax.experimental.pallas import tpu as pltpu

TWO_PI = 2.0 * math.pi


# --------------------------------------------------------------------- kernels


def _time_mean(h2d, bb, t_pad, t_valid):
    """Mean over the (possibly padded) time axis of a flattened (bb*t_pad, C) slab."""
    h3 = h2d.reshape(bb, t_pad, h2d.shape[-1])
    if t_pad != t_valid:
        # zero padded time rows before the sum (relu(bias) of zero-padded tokens != 0)
        tmask = jax.lax.broadcasted_iota(jnp.int32, (1, t_pad, 1), 1) < t_valid
        h3 = jnp.where(tmask, h3, 0.0)
    return jnp.sum(h3, axis=1) * jnp.float32(1.0 / t_valid)       # (bb, C) f32


def _make_fused_kernel(t_valid):
    """Layer-2/3 block-diagonal fusion; use when 2*D <= 256 (fills MXU columns)."""

    def kernel(x_ref, w1c_ref, b12_ref, w2bd_ref, w3bd_ref, b3c_ref, omega_ref, o_ref):
        Bb, T, D = x_ref.shape                  # T is the (padded) time length
        base = omega_ref.shape[1]
        mxu = w1c_ref.dtype                     # bf16 (or f32 for the tight self-test)

        # flattened token slab fills the MXU M dimension
        x2d = x_ref[...].reshape(Bb * T, D).astype(mxu)

        # layer 1, both MLPs fused along the output dim: (Bb*T, D) x (D, 2D)
        h1 = jnp.dot(x2d, w1c_ref[...], preferred_element_type=jnp.float32)
        h1 = jnp.maximum(h1 + b12_ref[0:1, :], 0.0)

        # layer 2, block-diagonal diag(w2, p2): one (Bb*T, 2D) x (2D, 2D) pass
        h2 = jnp.dot(h1.astype(mxu), w2bd_ref[...], preferred_element_type=jnp.float32)
        h2 = jnp.maximum(h2 + b12_ref[1:2, :], 0.0)

        # time-mean folded through the affine layer-3 (exact), then diag(w3, p3)
        h2m = _time_mean(h2, Bb, T, t_valid)                             # (Bb, 2D) f32
        wp = jnp.dot(h2m.astype(mxu), w3bd_ref[...],
                     preferred_element_type=jnp.float32) + b3c_ref[...]  # (Bb, 2*base)
        weights = wp[:, :base]
        phases = wp[:, base:]

        # sine synthesis; omega[t,k] = 2*pi/(k+2) * t precomputed on host
        sine = weights[:, None, :] * jnp.sin(omega_ref[...][None, :, :]
                                             + phases[:, None, :])
        o_ref[...] = jnp.sum(sine, axis=-1, keepdims=True)               # (Bb, T, 1)

    return kernel


def _make_split_kernel(t_valid):
    """Separate layer-2/3 weights (avoids block-diag FLOP doubling when D > 128)."""

    def kernel(x_ref, w1c_ref, b12_ref, w2_ref, p2_ref, w3_ref, p3_ref,
               b3c_ref, omega_ref, o_ref):
        Bb, T, D = x_ref.shape
        base = omega_ref.shape[1]
        mxu = w1c_ref.dtype

        x2d = x_ref[...].reshape(Bb * T, D).astype(mxu)

        h1 = jnp.dot(x2d, w1c_ref[...], preferred_element_type=jnp.float32)
        h1 = jnp.maximum(h1 + b12_ref[0:1, :], 0.0)
        h1w = h1[:, :D].astype(mxu)
        h1p = h1[:, D:].astype(mxu)

        h2w = jnp.maximum(jnp.dot(h1w, w2_ref[...], preferred_element_type=jnp.float32)
                          + b12_ref[1:2, :D], 0.0)
        h2p = jnp.maximum(jnp.dot(h1p, p2_ref[...], preferred_element_type=jnp.float32)
                          + b12_ref[1:2, D:], 0.0)

        h2w_m = _time_mean(h2w, Bb, T, t_valid)
        h2p_m = _time_mean(h2p, Bb, T, t_valid)

        weights = (jnp.dot(h2w_m.astype(mxu), w3_ref[...],
                           preferred_element_type=jnp.float32) + b3c_ref[:, :base])
        phases = (jnp.dot(h2p_m.astype(mxu), p3_ref[...],
                          preferred_element_type=jnp.float32) + b3c_ref[:, base:])

        sine = weights[:, None, :] * jnp.sin(omega_ref[...][None, :, :]
                                             + phases[:, None, :])
        o_ref[...] = jnp.sum(sine, axis=-1, keepdims=True)

    return kernel


# ------------------------------------------------------------------- utilities


@functools.lru_cache(maxsize=None)
def _single_buffering_supported():
    """Trace-time probe: does this Pallas build accept pipeline_mode=pl.Buffered(1)?"""
    def k(x_ref, o_ref):
        o_ref[...] = x_ref[...]
    try:
        spec = pl.BlockSpec((8, 128), lambda i: (0, 0), pipeline_mode=pl.Buffered(1))
        fn = pl.pallas_call(
            k,
            out_shape=jax.ShapeDtypeStruct((8, 128), jnp.float32),
            grid=(1,),
            in_specs=[spec],
            out_specs=pl.BlockSpec((8, 128), lambda i: (0, 0)),
        )
        jax.jit(fn).lower(jax.ShapeDtypeStruct((8, 128), jnp.float32)).compile()
        return True
    except Exception:
        return False


def _const_spec(shape):
    """BlockSpec for a grid-invariant (whole-array) operand."""
    kwargs = {}
    if _single_buffering_supported():
        kwargs["pipeline_mode"] = pl.Buffered(1)     # no need to double-buffer
    return pl.BlockSpec(shape, lambda b: (0, 0), **kwargs)


def _tpu_vmem_bytes():
    """Physical VMEM per TensorCore; conservative (v7x, 64 MiB) fallback."""
    try:
        return int(pltpu.get_tpu_info().vmem_capacity_bytes)
    except Exception:
        return 64 << 20


def _pick_batch_block(B, T, D, act_budget_bytes, *, target_rows=1024, min_rows=256):
    """Largest divisor of B whose per-step VMEM footprint fits the budget."""
    # per (Bb*T)-row bytes:
    #   x f32 (double-buffered) 8D | x bf16 copy 2D | h1 f32 8D + bf16 4D | h2 f32 8D
    #   out block (x2 buffers) + sine, lane-padded to 128 lanes: ~3*128*4
    row_bytes = 30 * D + 3 * 128 * 4
    weight_bytes = 24 * D * D + (1 << 20)     # bf16 packed weights (x2 buffers) + margin
    best = 1
    for bb in range(1, B + 1):
        if B % bb:
            continue
        if bb * T * row_bytes + weight_bytes > act_budget_bytes:
            break
        best = bb
        if bb * T >= target_rows:
            break
    # prefer >= 2 grid steps so both v7x TensorCores get work ("parallel" axis)
    if best == B and B % 2 == 0 and (B // 2) * T >= min_rows:
        best = B // 2
    return best


def init_params(key, embed_size, base):
    """PyTorch-Linear-style uniform init; weights stored as (in, out)."""
    def linear(k, fan_in, fan_out):
        bound = 1.0 / math.sqrt(fan_in)
        kw, kb = jax.random.split(k)
        W = jax.random.uniform(kw, (fan_in, fan_out), jnp.float32, -bound, bound)
        b = jax.random.uniform(kb, (1, fan_out), jnp.float32, -bound, bound)
        return W, b

    ks = jax.random.split(key, 6)
    p = {}
    p['w1'], p['b1'] = linear(ks[0], embed_size, embed_size)
    p['w2'], p['b2'] = linear(ks[1], embed_size, embed_size)
    p['w3'], p['b3'] = linear(ks[2], embed_size, base)
    p['p1'], p['q1'] = linear(ks[3], embed_size, embed_size)
    p['p2'], p['q2'] = linear(ks[4], embed_size, embed_size)
    p['p3'], p['q3'] = linear(ks[5], embed_size, base)
    return p


def _pack_params(params, fuse23, mxu_dtype):
    """Pack/fuse weights (bf16 for MXU) and biases (f32, two arrays total)."""
    f32 = jnp.float32
    D = params['w1'].shape[0]
    base = params['w3'].shape[1]

    w1c = jnp.concatenate([params['w1'], params['p1']], axis=1).astype(mxu_dtype)  # (D, 2D)
    b12 = jnp.stack([
        jnp.concatenate([params['b1'][0], params['q1'][0]]),
        jnp.concatenate([params['b2'][0], params['q2'][0]]),
    ]).astype(f32)                                                                  # (2, 2D)
    b3c = jnp.concatenate([params['b3'], params['q3']], axis=1).astype(f32)         # (1, 2*base)

    if fuse23:
        z = jnp.zeros((D, D), f32)
        zb = jnp.zeros((D, base), f32)
        w2bd = jnp.concatenate([
            jnp.concatenate([params['w2'], z], axis=1),
            jnp.concatenate([z, params['p2']], axis=1)], axis=0).astype(mxu_dtype)  # (2D, 2D)
        w3bd = jnp.concatenate([
            jnp.concatenate([params['w3'], zb], axis=1),
            jnp.concatenate([zb, params['p3']], axis=1)], axis=0).astype(mxu_dtype)  # (2D, 2*base)
        return [w1c, b12, w2bd, w3bd, b3c]

    return [w1c, b12,
            params['w2'].astype(mxu_dtype), params['p2'].astype(mxu_dtype),
            params['w3'].astype(mxu_dtype), params['p3'].astype(mxu_dtype),
            b3c]


# -------------------------------------------------------------------- forward


def periodic_forward(x, params, *, batch_block=None, fuse23=None,
                     mxu_dtype=jnp.bfloat16):
    B, T, D = x.shape
    base = params['w3'].shape[1]
    if fuse23 is None:
        fuse23 = (2 * D <= 256)          # block-diag fusion fills the 256-wide MXU

    # pad T to a sublane multiple so (Bb,T,D) <-> (Bb*T,D) reshapes are layout no-ops
    T_pad = -(-T // 8) * 8
    if T_pad != T:
        x = jnp.pad(x, ((0, 0), (0, T_pad - T), (0, 0)))

    # angular-frequency table omega[t, k] = 2*pi/(k+2) * t  (grid-invariant)
    t_idx = jnp.arange(T_pad, dtype=jnp.float32)[:, None]
    periods = jnp.arange(2, base + 2, dtype=jnp.float32)[None, :]
    omega = (TWO_PI / periods) * t_idx                                   # (T_pad, base)

    packed = _pack_params(params, fuse23, mxu_dtype)

    # generation-aware VMEM limit / activation budget
    vmem_cap = _tpu_vmem_bytes()
    if vmem_cap >= (100 << 20):          # v5e / v6e: 128 MiB physical VMEM
        vmem_limit, act_budget = 96 << 20, 28 << 20
    else:                                # v7x: 64 MiB physical VMEM
        vmem_limit, act_budget = 40 << 20, 10 << 20

    Bb = batch_block if batch_block is not None else _pick_batch_block(B, T_pad, D, act_budget)
    assert B % Bb == 0, "batch block must divide batch size"

    kernel = _make_fused_kernel(T) if fuse23 else _make_split_kernel(T)

    in_specs = [pl.BlockSpec((Bb, T_pad, D), lambda b: (b, 0, 0))]
    in_specs += [_const_spec(p.shape) for p in packed]
    in_specs.append(_const_spec((T_pad, base)))                          # omega

    # advisory cost estimate for XLA's scheduler
    if fuse23:
        mm_flops = (2 * B * T_pad * D * (2 * D)
                    + 2 * B * T_pad * (2 * D) * (2 * D)
                    + 2 * B * (2 * D) * (2 * base))
    else:
        mm_flops = (2 * B * T_pad * D * (2 * D)
                    + 2 * (2 * B * T_pad * D * D)
                    + 2 * (2 * B * D * base))
    flops = mm_flops + 6 * B * T_pad * base
    weight_bytes = sum(int(p.size) * p.dtype.itemsize for p in packed)
    bytes_accessed = (B * T_pad * D * 4 + B * T_pad * 4
                      + weight_bytes + T_pad * base * 4)

    call = pl.pallas_call(
        kernel,
        out_shape=jax.ShapeDtypeStruct((B, T_pad, 1), jnp.float32),
        grid_spec=pltpu.PrefetchScalarGridSpec(
            num_scalar_prefetch=0,
            grid=(B // Bb,),
            in_specs=in_specs,
            out_specs=pl.BlockSpec((Bb, T_pad, 1), lambda b: (b, 0, 0)),
        ),
        compiler_params=pltpu.CompilerParams(
            dimension_semantics=("parallel",),
            vmem_limit_bytes=vmem_limit,
        ),
        cost_estimate=pl.CostEstimate(
            flops=int(flops),
            transcendentals=int(B * T_pad * base),
            bytes_accessed=int(bytes_accessed),
        ),
    )

    pred = call(x, *packed, omega)                                       # (B, T_pad, 1)
    if T_pad != T:
        pred = pred[:, :T, :]
    # broadcast outside the kernel: the kernel never writes D redundant lanes
    return jnp.broadcast_to(pred, (B, T, D))


def periodic_reference(x, p):
    """Pure-JAX reference mirroring the PyTorch forward (unfused, f32)."""
    def mlp(a, W1, B1, W2, B2, W3, B3):
        h = jnp.maximum(a @ W1 + B1, 0.0)
        h = jnp.maximum(h @ W2 + B2, 0.0)
        return h @ W3 + B3

    B, T, D = x.shape
    base = p['w3'].shape[1]
    w = jnp.mean(mlp(x, p['w1'], p['b1'], p['w2'], p['b2'], p['w3'], p['b3']), axis=1)
    ph = jnp.mean(mlp(x, p['p1'], p['q1'], p['p2'], p['q2'], p['p3'], p['q3']), axis=1)
    t = jnp.arange(T, dtype=jnp.float32)[None, :, None]
    periods = jnp.arange(2, base + 2, dtype=jnp.float32)[None, None, :]
    sine = w[:, None, :] * jnp.sin(TWO_PI / periods * t + ph[:, None, :])
    pred = jnp.sum(sine, axis=-1)[..., None]
    return jnp.broadcast_to(pred, (B, T, D))


if __name__ == "__main__":
    # Small shapes consistent with the module: seq_length=8 -> base=min(20, 4)=4
    B, T, D = 2, 8, 32
    base = min(20, T // 2)

    key = jax.random.PRNGKey(0)
    k_x, k_p = jax.random.split(key)
    x = jax.random.normal(k_x, (B, T, D), dtype=jnp.float32)
    params = init_params(k_p, D, base)

    fwd = jax.jit(periodic_forward,
                  static_argnames=("batch_block", "fuse23", "mxu_dtype"))
    ref = periodic_reference(x, params)

    # 1) tight check of the kernel math with f32 MXU operands (fused path)
    out_f32 = jax.block_until_ready(fwd(x, params, mxu_dtype=jnp.float32))
    assert out_f32.shape == (B, T, D)
    assert jnp.allclose(out_f32, ref, atol=1e-4, rtol=1e-3), "f32 fused mismatch"

    # 2) tight check of the split-weights (large-D) kernel variant, f32
    out_split = jax.block_until_ready(fwd(x, params, fuse23=False,
                                          mxu_dtype=jnp.float32))
    assert jnp.allclose(out_split, ref, atol=1e-4, rtol=1e-3), "f32 split mismatch"

    # 3) default production path: bf16 MXU operands (looser tolerance)
    out = jax.block_until_ready(fwd(x, params))
    assert out.shape == (B, T, D)
    assert jnp.allclose(out, ref, atol=1e-1, rtol=1e-1), "bf16 fused mismatch"

    print("KERNEL_OK")
</pallas_src>

<mosaic_0001>
module attributes {stable_mosaic.version = 11 : i64} {
  func.func @kernel(%arg0: i32, %arg1: memref<2x8x32xf32, #tpu.memory_space<vmem>>, %arg2: memref<32x64xf32, #tpu.memory_space<vmem>>, %arg3: memref<2x64xf32, #tpu.memory_space<vmem>>, %arg4: memref<64x64xf32, #tpu.memory_space<vmem>>, %arg5: memref<64x8xf32, #tpu.memory_space<vmem>>, %arg6: memref<1x8xf32, #tpu.memory_space<vmem>>, %arg7: memref<8x4xf32, #tpu.memory_space<vmem>>, %arg8: memref<2x8x1xf32, #tpu.memory_space<vmem>>) attributes {dimension_semantics = [#tpu.dimension_semantics<parallel>], iteration_bounds = array<i64: 1>, scalar_prefetch = 0 : i64, scratch_operands = 0 : i64, tpu.core_type = #tpu.core_type<tc>, window_params = [{transform_indices = @transform_0, window_bounds = array<i64: 2, 8, 32>}, {pipeline_mode = #tpu.pipeline_mode<synchronous>, transform_indices = @transform_1, window_bounds = array<i64: 32, 64>}, {pipeline_mode = #tpu.pipeline_mode<synchronous>, transform_indices = @transform_2, window_bounds = array<i64: 2, 64>}, {pipeline_mode = #tpu.pipeline_mode<synchronous>, transform_indices = @transform_3, window_bounds = array<i64: 64, 64>}, {pipeline_mode = #tpu.pipeline_mode<synchronous>, transform_indices = @transform_4, window_bounds = array<i64: 64, 8>}, {pipeline_mode = #tpu.pipeline_mode<synchronous>, transform_indices = @transform_5, window_bounds = array<i64: 1, 8>}, {pipeline_mode = #tpu.pipeline_mode<synchronous>, transform_indices = @transform_6, window_bounds = array<i64: 8, 4>}, {transform_indices = @transform_7, window_bounds = array<i64: 2, 8, 1>}]} {
    %c0 = arith.constant 0 : index
    %c0_0 = arith.constant 0 : index
    %c0_1 = arith.constant 0 : index
    %0 = vector.load %arg1[%c0, %c0_0, %c0_1] : memref<2x8x32xf32, #tpu.memory_space<vmem>>, vector<2x8x32xf32>
    %1 = vector.shape_cast %0 : vector<2x8x32xf32> to vector<16x32xf32>
    %c0_2 = arith.constant 0 : index
    %c0_3 = arith.constant 0 : index
    %2 = vector.load %arg2[%c0_2, %c0_3] : memref<32x64xf32, #tpu.memory_space<vmem>>, vector<32x64xf32>
    %cst = arith.constant dense<0.000000e+00> : vector<16x64xf32>
    %3 = tpu.matmul %1, %2, %cst {dimension_numbers = #tpu.dot_dimension_numbers<[1], [0], [0], [1], [0, 0, 1, 1], [], []>} : vector<16x32xf32>, vector<32x64xf32>, vector<16x64xf32> -> vector<16x64xf32>
    %c0_4 = arith.constant 0 : index
    %c0_5 = arith.constant 0 : index
    %4 = vector.load %arg3[%c0_4, %c0_5] : memref<2x64xf32, #tpu.memory_space<vmem>>, vector<1x64xf32>
    %5 = vector.broadcast %4 : vector<1x64xf32> to vector<16x64xf32>
    %6 = arith.addf %3, %5 : vector<16x64xf32>
    %cst_6 = arith.constant 0.000000e+00 : f32
    %7 = vector.broadcast %cst_6 : f32 to vector<16x64xf32>
    %8 = arith.maximumf %6, %7 : vector<16x64xf32>
    %c0_7 = arith.constant 0 : index
    %c0_8 = arith.constant 0 : index
    %9 = vector.load %arg4[%c0_7, %c0_8] : memref<64x64xf32, #tpu.memory_space<vmem>>, vector<64x64xf32>
    %cst_9 = arith.constant dense<0.000000e+00> : vector<16x64xf32>
    %10 = tpu.matmul %8, %9, %cst_9 {dimension_numbers = #tpu.dot_dimension_numbers<[1], [0], [0], [1], [0, 0, 1, 1], [], []>} : vector<16x64xf32>, vector<64x64xf32>, vector<16x64xf32> -> vector<16x64xf32>
    %c1 = arith.constant 1 : index
    %c0_10 = arith.constant 0 : index
    %11 = vector.load %arg3[%c1, %c0_10] : memref<2x64xf32, #tpu.memory_space<vmem>>, vector<1x64xf32>
    %12 = vector.broadcast %11 : vector<1x64xf32> to vector<16x64xf32>
    %13 = arith.addf %10, %12 : vector<16x64xf32>
    %cst_11 = arith.constant 0.000000e+00 : f32
    %14 = vector.broadcast %cst_11 : f32 to vector<16x64xf32>
    %15 = arith.maximumf %13, %14 : vector<16x64xf32>
    %16 = vector.shape_cast %15 : vector<16x64xf32> to vector<2x8x64xf32>
    %cst_12 = arith.constant dense<0.000000e+00> : vector<2x64xf32>
    %17 = vector.multi_reduction <add>, %16, %cst_12 [1] : vector<2x8x64xf32> to vector<2x64xf32>
    %cst_13 = arith.constant 1.250000e-01 : f32
    %18 = vector.broadcast %cst_13 : f32 to vector<2x64xf32>
    %19 = arith.mulf %17, %18 : vector<2x64xf32>
    %c0_14 = arith.constant 0 : index
    %c0_15 = arith.constant 0 : index
    %20 = vector.load %arg5[%c0_14, %c0_15] : memref<64x8xf32, #tpu.memory_space<vmem>>, vector<64x8xf32>
    %cst_16 = arith.constant dense<0.000000e+00> : vector<2x8xf32>
    %21 = tpu.matmul %19, %20, %cst_16 {dimension_numbers = #tpu.dot_dimension_numbers<[1], [0], [0], [1], [0, 0, 1, 1], [], []>} : vector<2x64xf32>, vector<64x8xf32>, vector<2x8xf32> -> vector<2x8xf32>
    %c0_17 = arith.constant 0 : index
    %c0_18 = arith.constant 0 : index
    %22 = vector.load %arg6[%c0_17, %c0_18] : memref<1x8xf32, #tpu.memory_space<vmem>>, vector<1x8xf32>
    %23 = vector.broadcast %22 : vector<1x8xf32> to vector<2x8xf32>
    %24 = arith.addf %21, %23 : vector<2x8xf32>
    %25 = vector.extract_strided_slice %24 {offsets = [0, 0], sizes = [2, 4], strides = [1, 1]} : vector<2x8xf32> to vector<2x4xf32>
    %26 = vector.extract_strided_slice %24 {offsets = [0, 4], sizes = [2, 4], strides = [1, 1]} : vector<2x8xf32> to vector<2x4xf32>
    %27 = vector.shape_cast %25 : vector<2x4xf32> to vector<2x1x4xf32>
    %c0_19 = arith.constant 0 : index
    %c0_20 = arith.constant 0 : index
    %28 = vector.load %arg7[%c0_19, %c0_20] : memref<8x4xf32, #tpu.memory_space<vmem>>, vector<8x4xf32>
    %29 = vector.shape_cast %28 : vector<8x4xf32> to vector<1x8x4xf32>
    %30 = vector.shape_cast %26 : vector<2x4xf32> to vector<2x1x4xf32>
    %31 = vector.broadcast %29 : vector<1x8x4xf32> to vector<2x8x4xf32>
    %32 = vector.broadcast %30 : vector<2x1x4xf32> to vector<2x8x4xf32>
    %33 = arith.addf %31, %32 : vector<2x8x4xf32>
    %34 = math.sin %33 : vector<2x8x4xf32>
    %35 = vector.broadcast %27 : vector<2x1x4xf32> to vector<2x8x4xf32>
    %36 = arith.mulf %35, %34 : vector<2x8x4xf32>
    %cst_21 = arith.constant dense<0.000000e+00> : vector<2x8xf32>
    %37 = vector.multi_reduction <add>, %36, %cst_21 [2] : vector<2x8x4xf32> to vector<2x8xf32>
    %38 = vector.shape_cast %37 : vector<2x8xf32> to vector<2x8x1xf32>
    %c0_22 = arith.constant 0 : index
    %c0_23 = arith.constant 0 : index
    %c0_24 = arith.constant 0 : index
    %39 = vector.load %arg8[%c0_22, %c0_23, %c0_24] : memref<2x8x1xf32, #tpu.memory_space<vmem>>, vector<2x8x1xf32>
    tpu.vector_store %arg8[%c0_22, %c0_23, %c0_24], %38 {strides = array<i32>} : memref<2x8x1xf32, #tpu.memory_space<vmem>>, vector<2x8x1xf32>,
    return
  }
  func.func @transform_0(%arg0: i32) -> (i32, i32, i32) {
    %c0_i32 = arith.constant 0 : i32
    %c0_i32_0 = arith.constant 0 : i32
    %c0_i32_1 = arith.constant 0 : i32
    return %arg0, %c0_i32, %c0_i32_0 : i32, i32, i32
  }
  func.func @transform_1(%arg0: i32) -> (i32, i32) {
    %c0_i32 = arith.constant 0 : i32
    %c0_i32_0 = arith.constant 0 : i32
    %c0_i32_1 = arith.constant 0 : i32
    return %c0_i32, %c0_i32_0 : i32, i32
  }
  func.func @transform_2(%arg0: i32) -> (i32, i32) {
    %c0_i32 = arith.constant 0 : i32
    %c0_i32_0 = arith.constant 0 : i32
    %c0_i32_1 = arith.constant 0 : i32
    return %c0_i32, %c0_i32_0 : i32, i32
  }
  func.func @transform_3(%arg0: i32) -> (i32, i32) {
    %c0_i32 = arith.constant 0 : i32
    %c0_i32_0 = arith.constant 0 : i32
    %c0_i32_1 = arith.constant 0 : i32
    return %c0_i32, %c0_i32_0 : i32, i32
  }
  func.func @transform_4(%arg0: i32) -> (i32, i32) {
    %c0_i32 = arith.constant 0 : i32
    %c0_i32_0 = arith.constant 0 : i32
    %c0_i32_1 = arith.constant 0 : i32
    return %c0_i32, %c0_i32_0 : i32, i32
  }
  func.func @transform_5(%arg0: i32) -> (i32, i32) {
    %c0_i32 = arith.constant 0 : i32
    %c0_i32_0 = arith.constant 0 : i32
    %c0_i32_1 = arith.constant 0 : i32
    return %c0_i32, %c0_i32_0 : i32, i32
  }
  func.func @transform_6(%arg0: i32) -> (i32, i32) {
    %c0_i32 = arith.constant 0 : i32
    %c0_i32_0 = arith.constant 0 : i32
    %c0_i32_1 = arith.constant 0 : i32
    return %c0_i32, %c0_i32_0 : i32, i32
  }
  func.func @transform_7(%arg0: i32) -> (i32, i32, i32) {
    %c0_i32 = arith.constant 0 : i32
    %c0_i32_0 = arith.constant 0 : i32
    %c0_i32_1 = arith.constant 0 : i32
    return %arg0, %c0_i32, %c0_i32_0 : i32, i32, i32
  }
}

</mosaic_0001>

<llo_original>
// kernel: periodic_forward.1
$region0: #{periodic_forward.1}
  #allocation0 [shape = 'u32[]', space=smem, size = 0x4, offset = 0x4, fixed_abs, tag = 'smem constant byte address 0x4 - core index']
  #allocation1 [shape = 'u32[144,128]{1,0:T(1,128)}', space=vmem, size = 0x12000, scoped, tag = 'internal scratch']
  %s0 = inlined_call_operand.vmem [shape: f32[2,8,32], index: 0, kind: input, shape index: {}]
  %s1 = inlined_call_operand.vmem [shape: f32[32,64], index: 1, kind: input, shape index: {}]
  %s2 = inlined_call_operand.vmem [shape: f32[2,64], index: 2, kind: input, shape index: {}]
  %s3 = inlined_call_operand.vmem [shape: f32[64,64], index: 3, kind: input, shape index: {}]
  %s4 = inlined_call_operand.vmem [shape: f32[64,8], index: 4, kind: input, shape index: {}]
  %s5 = inlined_call_operand.vmem [shape: f32[1,8], index: 5, kind: input, shape index: {}]
  %s6 = inlined_call_operand.vmem [shape: f32[8,4], index: 6, kind: input, shape index: {}]
  %s7 = inlined_call_operand.vmem [shape: f32[2,8,1], index: 7, kind: output, shape index: {}]
  %s8 = sld [smem:[#allocation0]]
  $region38: #{periodic_forward.1} parent=0
    _
  %s10 = ssub.s32 1, %s8
  %s11 = scalar_select 0, %s10, %s8
  // Predicated region
  $region2: #{periodic_forward.1} parent=0 // pred_check
    _
  $region3: #{periodic_forward.1} parent=0 // pred_check_branch
    %13 = sbr.rel (0) target = $region5
  $region4: #{periodic_forward.1} parent=0 // pred_region
    _
  $region5: #{periodic_forward.1} parent=0 // pred_fallthru
    _
  // Predicated region
  $region6: #{periodic_forward.1} parent=0 // pred_check
    _
  $region7: #{periodic_forward.1} parent=0 // pred_check_branch
    %15 = sbr.rel (0) target = $region9
  $region8: #{periodic_forward.1} parent=0 // pred_region
    _
  $region9: #{periodic_forward.1} parent=0 // pred_fallthru
    _
  // Predicated region
  $region10: #{periodic_forward.1} parent=0 // pred_check
    _
  $region11: #{periodic_forward.1} parent=0 // pred_check_branch
    %17 = sbr.rel (0) target = $region13
  $region12: #{periodic_forward.1} parent=0 // pred_region
    _
  $region13: #{periodic_forward.1} parent=0 // pred_fallthru
    _
  // Predicated region
  $region14: #{periodic_forward.1} parent=0 // pred_check
    _
  $region15: #{periodic_forward.1} parent=0 // pred_check_branch
    %19 = sbr.rel (0) target = $region17
  $region16: #{periodic_forward.1} parent=0 // pred_region
    _
  $region17: #{periodic_forward.1} parent=0 // pred_fallthru
    _
  // Predicated region
  $region18: #{periodic_forward.1} parent=0 // pred_check
    _
  $region19: #{periodic_forward.1} parent=0 // pred_check_branch
    %21 = sbr.rel (0) target = $region21
  $region20: #{periodic_forward.1} parent=0 // pred_region
    _
  $region21: #{periodic_forward.1} parent=0 // pred_fallthru
    _
  // Predicated region
  $region22: #{periodic_forward.1} parent=0 // pred_check
    _
  $region23: #{periodic_forward.1} parent=0 // pred_check_branch
    %23 = sbr.rel (0) target = $region25
  $region24: #{periodic_forward.1} parent=0 // pred_region
    _
  $region25: #{periodic_forward.1} parent=0 // pred_fallthru
    _
  // Predicated region
  $region26: #{periodic_forward.1} parent=0 // pred_check
    _
  $region27: #{periodic_forward.1} parent=0 // pred_check_branch
    %25 = sbr.rel (0) target = $region29
  $region28: #{periodic_forward.1} parent=0 // pred_region
    _
  $region29: #{periodic_forward.1} parent=0 // pred_fallthru
    _
  %v26 = vld [vmem:[%s0] sm:$0xff]
  %v27 = vld [vmem:[%s0 + $0x8] sm:$0xff]
  %v28 = vld [vmem:[%s1] sm:$0xff]
  %v29 = vld [vmem:[%s1 + $0x8] sm:$0xff]
  %v30 = vld [vmem:[%s1 + $0x10] sm:$0xff]
  %v31 = vld [vmem:[%s1 + $0x18] sm:$0xff]
  %v32 = vld [vmem:[%s2] sm:$0x1]
  %v33 = vlaneseq
  %v34 = vshrl.u32 %v33, 7
  %v35 = vsub.s32 0, %v34
  %v36 = vrot.slane %v32, %v35
  %vm37 = vcmask 261120
  %v39 = vsel %vm37, %v26, 0
  %v42 = vsel %vm37, %v27, 0
  %44 = vmatprep.subr.mxu0 0.0
  %45 = vmatpush1.msra.mxu0 %v28
  %46 = vmatprep.subr.mxu0 0.0
  %47 = vmatpush1.msra.mxu0 %v29
  %48 = vmatprep.subr.mxu0 0.0
  %49 = vmatpush1.msra.mxu0 %v30
  %50 = vmatprep.subr.mxu0 0.0
  %51 = vmatpush1.msra.mxu0 %v31
  %52 = vmatprep.subr.mxu0 0.0
  %53 = vmatpush1.msra.mxu0 0.0
  %54 = vmatprep.subr.mxu0 0.0
  %55 = vmatpush1.msra.mxu0 0.0
  %56 = vmatprep.subr.mxu0 0.0
  %57 = vmatpush1.msra.mxu0 0.0
  %58 = vmatprep.subr.mxu0 0.0
  %59 = vmatpush1.msra.mxu0 0.0
  %60 = vmatprep.subr.mxu0 0.0
  %61 = vmatpush1.msra.mxu0 0.0
  %62 = vmatprep.subr.mxu0 0.0
  %63 = vmatpush1.msra.mxu0 0.0
  %64 = vmatprep.subr.mxu0 0.0
  %65 = vmatpush1.msra.mxu0 0.0
  %66 = vmatprep.subr.mxu0 0.0
  %67 = vmatpush1.msra.mxu0 0.0
  %68 = vmatprep.subr.mxu0 0.0
  %69 = vmatpush1.msra.mxu0 0.0
  %70 = vmatprep.subr.mxu0 0.0
  %71 = vmatpush1.msra.mxu0 0.0
  %72 = vmatprep.subr.mxu0 0.0
  %73 = vmatpush1.msra.mxu0 0.0
  %74 = vmatprep.subr.mxu0 0.0
  %75 = vmatpush1.msra.mxu0 0.0
  %76 = vmatprep.subr.mxu0 0.0
  %77 = vmatpush1.msra.mxu0 0.0
  %78 = vmatprep.subr.mxu0 0.0
  %79 = vmatpush1.msra.mxu0 0.0
  %80 = vmatprep.subr.mxu0 0.0
  %81 = vmatpush1.msra.mxu0 0.0
  %82 = vmatprep.subr.mxu0 0.0
  %83 = vmatpush1.msra.mxu0 0.0
  %84 = vmatprep.subr.mxu0 0.0
  %85 = vmatpush1.msra.mxu0 0.0
  %86 = vmatprep.subr.mxu0 0.0
  %87 = vmatpush1.msra.mxu0 0.0
  %88 = vmatprep.subr.mxu0 0.0
  %89 = vmatpush1.msra.mxu0 0.0
  %90 = vmatprep.subr.mxu0 0.0
  %91 = vmatpush1.msra.mxu0 0.0
  %92 = vmatprep.subr.mxu0 0.0
  %93 = vmatpush1.msra.mxu0 0.0
  %94 = vmatprep.subr.mxu0 0.0
  %95 = vmatpush1.msra.mxu0 0.0
  %96 = vmatprep.subr.mxu0 0.0
  %97 = vmatpush1.msra.mxu0 0.0
  %98 = vmatprep.subr.mxu0 0.0
  %99 = vmatpush1.msra.mxu0 0.0
  %100 = vmatprep.subr.mxu0 0.0
  %101 = vmatpush1.msra.mxu0 0.0
  %102 = vmatprep.subr.mxu0 0.0
  %103 = vmatpush1.msra.mxu0 0.0
  %104 = vmatprep.subr.mxu0 0.0
  %105 = vmatpush1.msra.mxu0 0.0
  %106 = vmatprep.subr.mxu0 0.0
  %107 = vmatpush1.msra.mxu0 0.0
  %108 = vmatprep.mubr.f32.mxu0 0.0
  %109 = vmatmul.mubr.f32.gmra.mrb[0].mxu0 %v39
  %v110 = vpop.f32.mrb[0].mxu0
  %v111 = vadd.f32 %v36, %v110
  %v112 = vpop.f32.mrb[0].mxu0
  %113 = vmatprep.mubr.f32.mxu0 0.0
  %114 = vmatmul.mubr.f32.gmra.mrb[0].mxu0 %v42
  %v115 = vpop.f32.mrb[0].mxu0
  %v116 = vadd.f32 %v36, %v115
  %v117 = vpop.f32.mrb[0].mxu0
  %118 = vdwg.mxu0
  %v119 = vmax.f32 %v111, 0.0
  %v120 = vmax.f32 %v116, 0.0
  %v121 = vld [vmem:[%s3] sm:$0xff]
  %v122 = vld [vmem:[%s3 + $0x8] sm:$0xff]
  %v123 = vld [vmem:[%s3 + $0x10] sm:$0xff]
  %v124 = vld [vmem:[%s3 + $0x18] sm:$0xff]
  %v125 = vld [vmem:[%s3 + $0x20] sm:$0xff]
  %v126 = vld [vmem:[%s3 + $0x28] sm:$0xff]
  %v127 = vld [vmem:[%s3 + $0x30] sm:$0xff]
  %v128 = vld [vmem:[%s3 + $0x38] sm:$0xff]
  %v129 = vld [vmem:[%s2 + $0x1] sm:$0x1]
  %v130 = vlaneseq
  %v131 = vshrl.u32 %v130, 7
  %v132 = vsub.s32 0, %v131
  %v133 = vrot.slane %v129, %v132
  %vm134 = vcmask 523264
  %v136 = vsel %vm134, %v119, 0
  %v139 = vsel %vm134, %v120, 0
  %141 = vmatprep.subr.mxu0 0.0
  %142 = vmatpush1.msra.mxu0 %v121
  %143 = vmatprep.subr.mxu0 0.0
  %144 = vmatpush1.msra.mxu0 %v122
  %145 = vmatprep.subr.mxu0 0.0
  %146 = vmatpush1.msra.mxu0 %v123
  %147 = vmatprep.subr.mxu0 0.0
  %148 = vmatpush1.msra.mxu0 %v124
  %149 = vmatprep.subr.mxu0 0.0
  %150 = vmatpush1.msra.mxu0 %v125
  %151 = vmatprep.subr.mxu0 0.0
  %152 = vmatpush1.msra.mxu0 %v126
  %153 = vmatprep.subr.mxu0 0.0
  %154 = vmatpush1.msra.mxu0 %v127
  %155 = vmatprep.subr.mxu0 0.0
  %156 = vmatpush1.msra.mxu0 %v128
  %157 = vmatprep.subr.mxu0 0.0
  %158 = vmatpush1.msra.mxu0 0.0
  %159 = vmatprep.subr.mxu0 0.0
  %160 = vmatpush1.msra.mxu0 0.0
  %161 = vmatprep.subr.mxu0 0.0
  %162 = vmatpush1.msra.mxu0 0.0
  %163 = vmatprep.subr.mxu0 0.0
  %164 = vmatpush1.msra.mxu0 0.0
  %165 = vmatprep.subr.mxu0 0.0
  %166 = vmatpush1.msra.mxu0 0.0
  %167 = vmatprep.subr.mxu0 0.0
  %168 = vmatpush1.msra.mxu0 0.0
  %169 = vmatprep.subr.mxu0 0.0
  %170 = vmatpush1.msra.mxu0 0.0
  %171 = vmatprep.subr.mxu0 0.0
  %172 = vmatpush1.msra.mxu0 0.0
  %173 = vmatprep.subr.mxu0 0.0
  %174 = vmatpush1.msra.mxu0 0.0
  %175 = vmatprep.subr.mxu0 0.0
  %176 = vmatpush1.msra.mxu0 0.0
  %177 = vmatprep.subr.mxu0 0.0
  %178 = vmatpush1.msra.mxu0 0.0
  %179 = vmatprep.subr.mxu0 0.0
  %180 = vmatpush1.msra.mxu0 0.0
  %181 = vmatprep.subr.mxu0 0.0
  %182 = vmatpush1.msra.mxu0 0.0
  %183 = vmatprep.subr.mxu0 0.0
  %184 = vmatpush1.msra.mxu0 0.0
  %185 = vmatprep.subr.mxu0 0.0
  %186 = vmatpush1.msra.mxu0 0.0
  %187 = vmatprep.subr.mxu0 0.0
  %188 = vmatpush1.msra.mxu0 0.0
  %189 = vmatprep.subr.mxu0 0.0
  %190 = vmatpush1.msra.mxu0 0.0
  %191 = vmatprep.subr.mxu0 0.0
  %192 = vmatpush1.msra.mxu0 0.0
  %193 = vmatprep.subr.mxu0 0.0
  %194 = vmatpush1.msra.mxu0 0.0
  %195 = vmatprep.subr.mxu0 0.0
  %196 = vmatpush1.msra.mxu0 0.0
  %197 = vmatprep.subr.mxu0 0.0
  %198 = vmatpush1.msra.mxu0 0.0
  %199 = vmatprep.subr.mxu0 0.0
  %200 = vmatpush1.msra.mxu0 0.0
  %201 = vmatprep.subr.mxu0 0.0
  %202 = vmatpush1.msra.mxu0 0.0
  %203 = vmatprep.subr.mxu0 0.0
  %204 = vmatpush1.msra.mxu0 0.0
  %205 = vmatprep.mubr.f32.mxu0 0.0
  %206 = vmatmul.mubr.f32.gmra.mrb[0].mxu0 %v136
  %v207 = vpop.f32.mrb[0].mxu0
  %v208 = vadd.f32 %v133, %v207
  %v209 = vpop.f32.mrb[0].mxu0
  %210 = vmatprep.mubr.f32.mxu0 0.0
  %211 = vmatmul.mubr.f32.gmra.mrb[0].mxu0 %v139
  %v212 = vpop.f32.mrb[0].mxu0
  %v213 = vadd.f32 %v133, %v212
  %v214 = vpop.f32.mrb[0].mxu0
  %215 = vdwg.mxu0
  %v216 = vmax.f32 %v208, 0.0
  %v217 = vmax.f32 %v213, 0.0
  %v218 = vsel %vm134, %v216, 0.0
  %v219 = vrot.slane %v218, 4
  %v220 = vadd.f32 %v218, %v219
  %v221 = vrot.slane %v220, 2
  %v222 = vadd.f32 %v220, %v221
  %v223 = vrot.slane %v222, 1
  %v224 = vadd.f32 %v222, %v223
  %v225 = vsel %vm134, %v217, 0.0
  %v226 = vrot.slane %v225, 4
  %v227 = vadd.f32 %v225, %v226
  %v228 = vrot.slane %v227, 2
  %v229 = vadd.f32 %v227, %v228
  %v230 = vrot.slane %v229, 1
  %v231 = vadd.f32 %v229, %v230
  %v232 = vmul.f32 %v224, 0.125
  %v233 = vmul.f32 %v231, 0.125
  %v234 = vld [vmem:[%s4] sm:$0xff]
  %v235 = vld [vmem:[%s4 + $0x8] sm:$0xff]
  %v236 = vld [vmem:[%s4 + $0x10] sm:$0xff]
  %v237 = vld [vmem:[%s4 + $0x18] sm:$0xff]
  %v238 = vld [vmem:[%s4 + $0x20] sm:$0xff]
  %v239 = vld [vmem:[%s4 + $0x28] sm:$0xff]
  %v240 = vld [vmem:[%s4 + $0x30] sm:$0xff]
  %v241 = vld [vmem:[%s4 + $0x38] sm:$0xff]
  %v242 = vld [vmem:[%s5] sm:$0x1]
  %v244 = vlaneseq
  %v245 = vshrl.u32 %v244, 7
  %v246 = vsub.s32 0, %v245
  %v247 = vrot.slane %v242, %v246
  %vm251 = vcmask 1041409
  %v252 = vsel %vm251, %v233, %v232
  %v253 = vsel %vm134, %v252, 0
  %255 = vmatprep.subr.mxu0 0.0
  %256 = vmatpush1.msra.mxu0 %v234
  %257 = vmatprep.subr.mxu0 0.0
  %258 = vmatpush1.msra.mxu0 %v235
  %259 = vmatprep.subr.mxu0 0.0
  %260 = vmatpush1.msra.mxu0 %v236
  %261 = vmatprep.subr.mxu0 0.0
  %262 = vmatpush1.msra.mxu0 %v237
  %263 = vmatprep.subr.mxu0 0.0
  %264 = vmatpush1.msra.mxu0 %v238
  %265 = vmatprep.subr.mxu0 0.0
  %266 = vmatpush1.msra.mxu0 %v239
  %267 = vmatprep.subr.mxu0 0.0
  %268 = vmatpush1.msra.mxu0 %v240
  %269 = vmatprep.subr.mxu0 0.0
  %270 = vmatpush1.msra.mxu0 %v241
  %271 = vmatprep.subr.mxu0 0.0
  %272 = vmatpush1.msra.mxu0 0.0
  %273 = vmatprep.subr.mxu0 0.0
  %274 = vmatpush1.msra.mxu0 0.0
  %275 = vmatprep.subr.mxu0 0.0
  %276 = vmatpush1.msra.mxu0 0.0
  %277 = vmatprep.subr.mxu0 0.0
  %278 = vmatpush1.msra.mxu0 0.0
  %279 = vmatprep.subr.mxu0 0.0
  %280 = vmatpush1.msra.mxu0 0.0
  %281 = vmatprep.subr.mxu0 0.0
  %282 = vmatpush1.msra.mxu0 0.0
  %283 = vmatprep.subr.mxu0 0.0
  %284 = vmatpush1.msra.mxu0 0.0
  %285 = vmatprep.subr.mxu0 0.0
  %286 = vmatpush1.msra.mxu0 0.0
  %287 = vmatprep.subr.mxu0 0.0
  %288 = vmatpush1.msra.mxu0 0.0
  %289 = vmatprep.subr.mxu0 0.0
  %290 = vmatpush1.msra.mxu0 0.0
  %291 = vmatprep.subr.mxu0 0.0
  %292 = vmatpush1.msra.mxu0 0.0
  %293 = vmatprep.subr.mxu0 0.0
  %294 = vmatpush1.msra.mxu0 0.0
  %295 = vmatprep.subr.mxu0 0.0
  %296 = vmatpush1.msra.mxu0 0.0
  %297 = vmatprep.subr.mxu0 0.0
  %298 = vmatpush1.msra.mxu0 0.0
  %299 = vmatprep.subr.mxu0 0.0
  %300 = vmatpush1.msra.mxu0 0.0
  %301 = vmatprep.subr.mxu0 0.0
  %302 = vmatpush1.msra.mxu0 0.0
  %303 = vmatprep.subr.mxu0 0.0
  %304 = vmatpush1.msra.mxu0 0.0
  %305 = vmatprep.subr.mxu0 0.0
  %306 = vmatpush1.msra.mxu0 0.0
  %307 = vmatprep.subr.mxu0 0.0
  %308 = vmatpush1.msra.mxu0 0.0
  %309 = vmatprep.subr.mxu0 0.0
  %310 = vmatpush1.msra.mxu0 0.0
  %311 = vmatprep.subr.mxu0 0.0
  %312 = vmatpush1.msra.mxu0 0.0
  %313 = vmatprep.subr.mxu0 0.0
  %314 = vmatpush1.msra.mxu0 0.0
  %315 = vmatprep.subr.mxu0 0.0
  %316 = vmatpush1.msra.mxu0 0.0
  %317 = vmatprep.subr.mxu0 0.0
  %318 = vmatpush1.msra.mxu0 0.0
  %319 = vmatprep.mubr.f32.mxu0 0.0
  %320 = vmatmul.mubr.f32.gmra.mrb[0].mxu0 %v253
  %v321 = vpop.f32.mrb[0].mxu0
  %v322 = vadd.f32 %v247, %v321
  %v323 = vpop.f32.mrb[0].mxu0
  %324 = vdwg.mxu0
  %v327 = vunpack.c.l.s4 1966171168
  %v328 = vunpack.c.0.s8 %v327
  %v329 = vlaneseq
  %v330 = vshrl.u32 %v329, 7
  %v331 = vsub.s32 %v328, %v330
  %v332 = vrot.slane %v322, %v331
  %v333 = vcombine.high %v332, %v332
  %v335 = vunpack.c.l.s4 1966171168
  %v336 = vunpack.c.0.s8 %v335
  %v337 = vlaneseq
  %v338 = vshrl.u32 %v337, 7
  %v339 = vsub.s32 %v336, %v338
  %v340 = vrot.slane %v332, %v339
  %v342 = vunpack.c.l.s4 1966171168
  %v343 = vunpack.c.0.s8 %v342
  %v344 = vlaneseq
  %v345 = vshrl.u32 %v344, 7
  %v346 = vsub.s32 %v343, %v345
  %v347 = vrot.slane %v333, %v346
  %v348 = vld [vmem:[%s6] sm:$0xff]
  %v349 = vlaneseq
  %v350 = vshrl.u32 %v349, 7
  %v351 = vsub.s32 0, %v350
  %v352 = vrot.slane %v340, %v351
  %v353 = vlaneseq
  %v354 = vshrl.u32 %v353, 7
  %v355 = vsub.s32 0, %v354
  %v356 = vrot.slane %v347, %v355
  %357 = vrot.lane.b32.xlu0 %v352, 124
  %v358 = vpop.permute.xlu0 %357
  %359 = vrot.lane.b32.xlu0 %v356, 124
  %v360 = vpop.permute.xlu0 %359
  %v363 = vadd.f32 %v348, %v358
  %v364 = vadd.f32 %v348, %v360
  %v365 = vand.u32 2147483647, %v363
  %vm366 = vcmp.le.f32.partialorder %v365, 0.7853982
  %vm367 = vcmp.lt.s32.totalorder %v363, 0
  %v368 = vand.u32 %v363, 2139095040
  %v369 = vshrl.u32 %v368, 23
  %v370 = vsub.s32 %v369, 127
  %v371 = vand.u32 2147483647, %v363
  %v372 = vand.u32 %v371, 8388607
  %v373 = vor.u32 %v372, 8388608
  %v374 = vsub.s32 0, %v373
  %v375 = vadd.s32 %v370, 1
  %vm376 = vcmp.gt.s32.totalorder %v375, 0
  %v377 = vsel %vm376, %v375, 0
  %v378 = vshrl.u32 %v377, 5
  %v379 = vand.u32 %v377, 31
  %v380 = vsub.s32 32, %v379
  %v381 = vshrl.u32 683565275, %v380
  %v382 = vshll.u32 683565275, %v379
  %v383 = vshrl.u32 2475754826, %v380
  %v384 = vor.u32 %v382, %v383
  %v385 = vshll.u32 2475754826, %v379
  %v386 = vshrl.u32 2131351028, %v380
  %v387 = vor.u32 %v385, %v386
  %v388 = vshll.u32 2131351028, %v379
  %v389 = vshrl.u32 2102212464, %v380
  %v390 = vor.u32 %v388, %v389
  %v391 = vshll.u32 2102212464, %v379
  %v392 = vshrl.u32 920167782, %v380
  %v393 = vor.u32 %v391, %v392
  %v394 = vshll.u32 920167782, %v379
  %v395 = vshrl.u32 1326507024, %v380
  %v396 = vor.u32 %v394, %v395
  %vm397 = vcmp.lt.s32.totalorder %v378, 1
  %vm398 = vcmp.lt.s32.totalorder %v378, 2
  %vm399 = vcmp.lt.s32.totalorder %v378, 3
  %vm400 = vcmp.lt.s32.totalorder %v378, 4
  %v401 = vsel %vm397, %v381, %v384
  %v402 = vsel %vm400, %v390, 2102212464
  %v403 = vsel %vm399, %v387, %v402
  %v404 = vsel %vm398, %v401, %v403
  %v405 = vsel %vm397, %v384, %v387
  %v406 = vsel %vm400, %v393, 920167782
  %v407 = vsel %vm399, %v390, %v406
  %v408 = vsel %vm398, %v405, %v407
  %v409 = vsel %vm397, %v387, %v390
  %v410 = vsel %vm400, %v396, 1326507024
  %v411 = vsel %vm399, %v393, %v410
  %v412 = vsel %vm398, %v409, %v411
  %v413 = vshll.u32 %v373, 8
  %v414 = vmul.u32.u64.compose %v413, %v412
  %v415 = vextract.low.u32 %v414
  %v416 = vextract.high.u32 %v414
  %v417 = vmul.u32.u64.compose %v413, %v408
  %v418 = vextract.low.u32 %v417
  %v419 = vextract.high.u32 %v417
  %v420 = vmul.u32 %v413, %v404
  %v421 = vadd.s32 %v416, %v418
  %vm422 = vc.u32 %v416, %v418
  %v423 = vadd.s32 %v419, 1
  %v424 = vsel %vm422, %v423, %v419
  %v425 = vadd.s32 %v420, %v424
  %v426 = vadd.s32 %v425, 536870912
  %v427 = vshrl.u32 %v426, 30
  %v428 = vshll.u32 %v427, 30
  %v429 = vsub.s32 %v425, %v428
  %vm430 = vcmp.lt.s32.totalorder %v429, 0
  %v431 = vsub.s32 0, %v429
  %v432 = vsel %vm430, %v431, %v429
  %v433 = vclz %v432
  %v434 = vsub.s32 %v433, 2
  %vm435 = vcmp.gt.s32.totalorder 0, %v434
  %v436 = vsel %vm435, 0, %v434
  %v437 = vsub.s32 32, %v436
  %v438 = vshll.u32 %v429, %v436
  %v439 = vshrl.u32 %v421, %v437
  %v440 = vor.u32 %v438, %v439
  %v441 = vsub.s32 4294967266, %v436
  %v442 = vadd.s32 %v441, 127
  %v443 = vshll.u32 %v442, 23
  %v444 = vor.u32 4788187, %v443
  %v445 = vand.u32 2147483647, %v444
  %v447 = vcvt.s32.f32 %v440
  %v448 = vmul.f32 %v447, %v445
  %v449 = vxor.u32 %v448, 2147483648
  %v450 = vsel %vm367, %v449, %v448
  %v451 = vsub.s32 4, %v427
  %v452 = vsel %vm367, %v451, %v427
  %v453 = vsel %vm366, %v363, %v450
  %v454 = vsel %vm366, 0, %v452
  %v455 = vcosq.f32.pop %v453
  %v456 = vsinq.f32.pop %v453
  %vm457 = vweird.f32 %v363
  %v458 = vadd.s32 %v454, 3
  %v459 = vand.u32 %v458, 3
  %vm460 = vcmp.lt.s32.totalorder %v459, 2
  %vm461 = vcmp.eq.s32.totalorder %v459, 0
  %v462 = vxor.u32 %v456, 2147483648
  %v463 = vsel %vm461, %v455, %v462
  %vm464 = vcmp.eq.s32.totalorder %v459, 2
  %v465 = vxor.u32 %v455, 2147483648
  %v466 = vsel %vm464, %v465, %v456
  %v467 = vsel %vm460, %v463, %v466
  %v468 = vsel %vm457, nan, %v467
  %v469 = vand.u32 2147483647, %v364
  %vm470 = vcmp.le.f32.partialorder %v469, 0.7853982
  %vm471 = vcmp.lt.s32.totalorder %v364, 0
  %v472 = vand.u32 %v364, 2139095040
  %v473 = vshrl.u32 %v472, 23
  %v474 = vsub.s32 %v473, 127
  %v475 = vand.u32 2147483647, %v364
  %v476 = vand.u32 %v475, 8388607
  %v477 = vor.u32 %v476, 8388608
  %v478 = vsub.s32 0, %v477
  %v479 = vadd.s32 %v474, 1
  %vm480 = vcmp.gt.s32.totalorder %v479, 0
  %v481 = vsel %vm480, %v479, 0
  %v482 = vshrl.u32 %v481, 5
  %v483 = vand.u32 %v481, 31
  %v484 = vsub.s32 32, %v483
  %v485 = vshrl.u32 683565275, %v484
  %v486 = vshll.u32 683565275, %v483
  %v487 = vshrl.u32 2475754826, %v484
  %v488 = vor.u32 %v486, %v487
  %v489 = vshll.u32 2475754826, %v483
  %v490 = vshrl.u32 2131351028, %v484
  %v491 = vor.u32 %v489, %v490
  %v492 = vshll.u32 2131351028, %v483
  %v493 = vshrl.u32 2102212464, %v484
  %v494 = vor.u32 %v492, %v493
  %v495 = vshll.u32 2102212464, %v483
  %v496 = vshrl.u32 920167782, %v484
  %v497 = vor.u32 %v495, %v496
  %v498 = vshll.u32 920167782, %v483
  %v499 = vshrl.u32 1326507024, %v484
  %v500 = vor.u32 %v498, %v499
  %vm501 = vcmp.lt.s32.totalorder %v482, 1
  %vm502 = vcmp.lt.s32.totalorder %v482, 2
  %vm503 = vcmp.lt.s32.totalorder %v482, 3
  %vm504 = vcmp.lt.s32.totalorder %v482, 4
  %v505 = vsel %vm501, %v485, %v488
  %v506 = vsel %vm504, %v494, 2102212464
  %v507 = vsel %vm503, %v491, %v506
  %v508 = vsel %vm502, %v505, %v507
  %v509 = vsel %vm501, %v488, %v491
  %v510 = vsel %vm504, %v497, 920167782
  %v511 = vsel %vm503, %v494, %v510
  %v512 = vsel %vm502, %v509, %v511
  %v513 = vsel %vm501, %v491, %v494
  %v514 = vsel %vm504, %v500, 1326507024
  %v515 = vsel %vm503, %v497, %v514
  %v516 = vsel %vm502, %v513, %v515
  %v517 = vshll.u32 %v477, 8
  %v518 = vmul.u32.u64.compose %v517, %v516
  %v519 = vextract.low.u32 %v518
  %v520 = vextract.high.u32 %v518
  %v521 = vmul.u32.u64.compose %v517, %v512
  %v522 = vextract.low.u32 %v521
  %v523 = vextract.high.u32 %v521
  %v524 = vmul.u32 %v517, %v508
  %v525 = vadd.s32 %v520, %v522
  %vm526 = vc.u32 %v520, %v522
  %v527 = vadd.s32 %v523, 1
  %v528 = vsel %vm526, %v527, %v523
  %v529 = vadd.s32 %v524, %v528
  %v530 = vadd.s32 %v529, 536870912
  %v531 = vshrl.u32 %v530, 30
  %v532 = vshll.u32 %v531, 30
  %v533 = vsub.s32 %v529, %v532
  %vm534 = vcmp.lt.s32.totalorder %v533, 0
  %v535 = vsub.s32 0, %v533
  %v536 = vsel %vm534, %v535, %v533
  %v537 = vclz %v536
  %v538 = vsub.s32 %v537, 2
  %vm539 = vcmp.gt.s32.totalorder 0, %v538
  %v540 = vsel %vm539, 0, %v538
  %v541 = vsub.s32 32, %v540
  %v542 = vshll.u32 %v533, %v540
  %v543 = vshrl.u32 %v525, %v541
  %v544 = vor.u32 %v542, %v543
  %v545 = vsub.s32 4294967266, %v540
  %v546 = vadd.s32 %v545, 127
  %v547 = vshll.u32 %v546, 23
  %v548 = vor.u32 4788187, %v547
  %v549 = vand.u32 2147483647, %v548
  %v551 = vcvt.s32.f32 %v544
  %v552 = vmul.f32 %v551, %v549
  %v553 = vxor.u32 %v552, 2147483648
  %v554 = vsel %vm471, %v553, %v552
  %v555 = vsub.s32 4, %v531
  %v556 = vsel %vm471, %v555, %v531
  %v557 = vsel %vm470, %v364, %v554
  %v558 = vsel %vm470, 0, %v556
  %v559 = vcosq.f32.pop %v557
  %v560 = vsinq.f32.pop %v557
  %vm561 = vweird.f32 %v364
  %v562 = vadd.s32 %v558, 3
  %v563 = vand.u32 %v562, 3
  %vm564 = vcmp.lt.s32.totalorder %v563, 2
  %vm565 = vcmp.eq.s32.totalorder %v563, 0
  %v566 = vxor.u32 %v560, 2147483648
  %v567 = vsel %vm565, %v559, %v566
  %vm568 = vcmp.eq.s32.totalorder %v563, 2
  %v569 = vxor.u32 %v559, 2147483648
  %v570 = vsel %vm568, %v569, %v560
  %v571 = vsel %vm564, %v567, %v570
  %v572 = vsel %vm561, nan, %v571
  %v575 = vmul.f32 %v352, %v468
  %v576 = vmul.f32 %v356, %v572
  %vm577 = vcmask 31744
  %v578 = vsel %vm577, %v575, 0.0
  %579 = vadd.xlane.f32.xlu0 %v578
  %v580 = vpop.xlane.xlu0 %579
  %v581 = vsel %vm577, %v576, 0.0
  %582 = vadd.xlane.f32.xlu0 %v581
  %v583 = vpop.xlane.xlu0 %582
  %vm584 = vcmask 7168
  %585 = vst.msk [vmem:[%s7] sm:$0xff] %vm584, %v580
  %586 = vst.msk [vmem:[%s7 + $0x8] sm:$0xff] %vm584, %v583
  // Predicated region
  $region30: #{periodic_forward.1} parent=0 // pred_check
    _
  $region31: #{periodic_forward.1} parent=0 // pred_check_branch
    %588 = sbr.rel (0) target = $region33
  $region32: #{periodic_forward.1} parent=0 // pred_region
    _
  $region33: #{periodic_forward.1} parent=0 // pred_fallthru
    _
  // Predicated region
  $region34: #{periodic_forward.1} parent=0 // pred_check
    _
  $region35: #{periodic_forward.1} parent=0 // pred_check_branch
    %590 = sbr.rel (0) target = $region37
  $region36: #{periodic_forward.1} parent=0 // pred_region
    _
  $region37: #{periodic_forward.1} parent=0 // pred_fallthru
    _

</llo_original>
